<compile_context>
chip_gen: v5e
topology: v5e:2x2
jax: 0.10.0
libtpu: 0.0.40
codegen_flags: <defaults>
</compile_context>

<pallas_src>
import jax
import jax.numpy as jnp
from jax.experimental import pallas as pl
from jax.experimental.pallas import tpu as pltpu

LANE = 128  # TPU vreg lane width


def _vmem_capacity_bytes():
    """Physical VMEM per TensorCore; conservative 64 MiB (v7x) if unknown."""
    try:
        info = pltpu.get_tpu_info()
        for name in ("vmem_capacity_bytes", "vmem_size_bytes", "vmem_bytes"):
            v = getattr(info, name, None)
            if v:
                return int(v)
    except Exception:
        pass
    return 64 * 1024 * 1024


def _max_local_dtype(x_dtype):
    """Dtype for the per-slab running max: native bf16 on v6e/v7x, f32 elsewhere."""
    if x_dtype == jnp.float32:
        return jnp.float32
    if x_dtype == jnp.bfloat16:
        try:
            kind = jax.devices()[0].device_kind.lower()
        except Exception:
            kind = ""
        # v5e has no bf16 VALU -> keep the max path in f32 there.
        if ("v5 lite" in kind) or ("v5e" in kind) or ("v5litepod" in kind):
            return jnp.float32
        return jnp.bfloat16
    return jnp.float32


def _pick_tiles(B, C, HW, itemsize, max_slabs):
    """Choose (B_tile, C_tile, T_HW).

    Constraints:
      * x block (B_tile, C_tile, T_HW): C_tile % 8 == 0 or C_tile == C;
        T_HW % 128 == 0 or T_HW == HW.
      * out block (1, B_tile, C_tile): B_tile % 8 == 0 or B_tile == B;
        last dim equals the (padded) output array's last dim by construction.
    Heuristics:
      * rows = B_tile * C_tile kept small enough (<= ~64 for large HW) that the
        per-step 128-lane partial sum/max stay register-resident; for small HW
        rows grow (<= 256) so per-step blocks stay ~1 MiB (amortize ~0.35 us/step).
    """
    if B > 8 and B % 8 == 0:
        B_tile = 8
    else:
        B_tile = B

    rows_cap = int(min(256, max(64, (1 << 20) // max(1, HW * itemsize))))
    c_cap = max(8, (rows_cap // max(1, B_tile)) // 8 * 8)

    if C <= c_cap:
        C_tile = C
    else:
        C_tile = c_cap  # fallback: padded boundary channel tile (outputs discarded)
        for ct in range(c_cap, 7, -8):
            if C % ct == 0:
                C_tile = ct
                break

    if HW <= max_slabs * LANE:
        T_HW = HW                         # whole spatial extent per step
    else:
        T_HW = max_slabs * LANE           # big, 128-aligned streaming block

    return B_tile, C_tile, int(T_HW)


def _make_kernel(*, HW, T_HW, num_hw, B_tile, C_tile, max_local_dtype):
    n_full = T_HW // LANE                 # full 128-lane slabs in a regular step
    tail = T_HW % LANE                    # nonzero only when num_hw == 1 (T_HW == HW)

    boundary = False
    n_full_last = n_full
    tail_last = tail
    if num_hw > 1:
        rem = HW - (num_hw - 1) * T_HW    # valid lanes in the final (padded) block
        boundary = (rem != T_HW)
        n_full_last = rem // LANE
        tail_last = rem % LANE

    inv_hw = 1.0 / HW

    def kernel(x_ref, avg_ref, max_ref, sum_acc, max_acc):
        s = pl.program_id(2)

        @pl.when(s == 0)
        def _init():
            sum_acc[...] = jnp.zeros(sum_acc.shape, sum_acc.dtype)
            max_acc[...] = jnp.full(max_acc.shape, -jnp.inf, max_acc.dtype)

        def accumulate(nf, tw):
            # 128-lane partials for this grid step live in locals (vregs); the
            # persistent scratch is updated once per step, not once per slab.
            if nf > 0:
                s0 = x_ref[:, :, 0:LANE]
                psum = s0.astype(jnp.float32)
                pmax = s0.astype(max_local_dtype)
                for j in range(1, nf):                      # static unroll (<= max_slabs)
                    sl = x_ref[:, :, j * LANE:(j + 1) * LANE]
                    psum = psum + sl.astype(jnp.float32)
                    pmax = jnp.maximum(pmax, sl.astype(max_local_dtype))
                sum_acc[...] += jnp.sum(psum, axis=-1)
                max_acc[...] = jnp.maximum(
                    max_acc[...], jnp.max(pmax, axis=-1).astype(jnp.float32))
            if tw > 0:
                # Compile-time partial-width slice: no runtime masks needed.
                off = nf * LANE
                tl = x_ref[:, :, off:off + tw]
                sum_acc[...] += jnp.sum(tl.astype(jnp.float32), axis=-1)
                max_acc[...] = jnp.maximum(
                    max_acc[...],
                    jnp.max(tl.astype(max_local_dtype), axis=-1).astype(jnp.float32))

        if boundary:
            # Only the final spatial step pays for partial-slab handling.
            @pl.when(s < num_hw - 1)
            def _full_steps():
                accumulate(n_full, 0)

            @pl.when(s == num_hw - 1)
            def _last_step():
                accumulate(n_full_last, tail_last)
        else:
            accumulate(n_full, tail)

        @pl.when(s == num_hw - 1)
        def _finalize():
            avg_ref[0, :, :] = (sum_acc[...] * inv_hw).astype(avg_ref.dtype)
            max_ref[0, :, :] = max_acc[...].astype(max_ref.dtype)

    return kernel


def channel_attention(x, w1, w2, *, max_slabs_per_step=64):
    """CBAM ChannelAttention forward.

    x:  (B, C, H, W)
    w1: (C // 16, C)  first 1x1 conv weight (squeezed), bias-free
    w2: (C, C // 16)  second 1x1 conv weight (squeezed), bias-free
    Returns sigmoid(fc(avg_pool(x)) + fc(max_pool(x))) with shape (B, C, 1, 1).
    """
    B, C, H, W = x.shape
    HW = H * W
    x_flat = x.reshape(B, C, HW)
    itemsize = x_flat.dtype.itemsize

    B_tile, C_tile, T_HW = _pick_tiles(B, C, HW, itemsize, max_slabs_per_step)
    num_b = pl.cdiv(B, B_tile)
    num_c = pl.cdiv(C, C_tile)
    num_hw = pl.cdiv(HW, T_HW)

    kernel = _make_kernel(HW=HW, T_HW=T_HW, num_hw=num_hw, B_tile=B_tile,
                          C_tile=C_tile,
                          max_local_dtype=_max_local_dtype(x_flat.dtype))

    # VMEM accounting: double-buffered x blocks dominate (scratch + outputs are
    # a few KiB; no weights inside the kernel). Limit derived from chip VMEM.
    cap = _vmem_capacity_bytes()
    x_db_bytes = 2 * B_tile * C_tile * T_HW * itemsize
    vmem_limit = int(min((cap * 3) // 4,
                         max(32 * 1024 * 1024, x_db_bytes + (8 << 20))))

    pooled_shape = jax.ShapeDtypeStruct((num_c, B, C_tile), jnp.float32)
    avg_raw, max_raw = pl.pallas_call(
        kernel,
        out_shape=(pooled_shape, pooled_shape),
        grid_spec=pltpu.PrefetchScalarGridSpec(
            num_scalar_prefetch=0,
            grid=(num_b, num_c, num_hw),      # spatial reduction axis innermost
            in_specs=[
                pl.BlockSpec((B_tile, C_tile, T_HW), lambda b, c, s: (b, c, s)),
            ],
            out_specs=[
                pl.BlockSpec((1, B_tile, C_tile), lambda b, c, s: (c, b, 0)),
                pl.BlockSpec((1, B_tile, C_tile), lambda b, c, s: (c, b, 0)),
            ],
            scratch_shapes=[
                pltpu.VMEM((B_tile, C_tile), jnp.float32),   # running sum (scalars)
                pltpu.VMEM((B_tile, C_tile), jnp.float32),   # running max (scalars)
            ],
        ),
        compiler_params=pltpu.CompilerParams(
            # batch and channel tiles are independent -> both TCs get work even
            # for B <= 8; the spatial axis carries the resident accumulators.
            dimension_semantics=("parallel", "parallel", "arbitrary"),
            vmem_limit_bytes=vmem_limit,
        ),
    )(x_flat)

    # Tiny (B, C) tensors from here on: shared MLP + sigmoid in plain XLA.
    def to_bc(p):
        return jnp.transpose(p, (1, 0, 2)).reshape(B, num_c * C_tile)[:, :C]

    avg = to_bc(avg_raw)                                   # (B, C) f32
    mx = to_bc(max_raw)                                    # (B, C) f32
    pooled = jnp.concatenate([avg, mx], axis=0)            # (2B, C)
    w1t = jnp.asarray(w1, jnp.float32).T                   # (C, hidden)
    w2t = jnp.asarray(w2, jnp.float32).T                   # (hidden, C)
    hi = jax.lax.Precision.HIGHEST
    h = jnp.maximum(jnp.dot(pooled, w1t, precision=hi), 0.0)
    y = jnp.dot(h, w2t, precision=hi)
    out = jax.nn.sigmoid(y[:B] + y[B:]).astype(x.dtype)
    return out.reshape(B, C, 1, 1)


def _reference(x, w1, w2):
    # Pure-JAX reference mirroring the PyTorch forward.
    avg = jnp.mean(x.astype(jnp.float32), axis=(2, 3))     # (B, C)
    mx = jnp.max(x.astype(jnp.float32), axis=(2, 3))       # (B, C)
    hi = jax.lax.Precision.HIGHEST

    def fc(v):
        h = jnp.maximum(jnp.dot(v, w1.T.astype(jnp.float32), precision=hi), 0.0)
        return jnp.dot(h, w2.T.astype(jnp.float32), precision=hi)

    out = jax.nn.sigmoid(fc(avg) + fc(mx)).astype(x.dtype)
    return out[:, :, None, None]


if __name__ == "__main__":
    key = jax.random.PRNGKey(0)
    kx, k1, k2, kx2, kx3, k3, k4 = jax.random.split(key, 7)

    # Test 1: small aligned shapes (single spatial step, no tail, single C tile).
    B, C, H, W = 2, 32, 16, 16
    hidden = C // 16
    x = jax.random.normal(kx, (B, C, H, W), dtype=jnp.float32)
    w1 = jax.random.normal(k1, (hidden, C), dtype=jnp.float32) * (2.0 / C) ** 0.5
    w2 = jax.random.normal(k2, (C, hidden), dtype=jnp.float32) * (2.0 / hidden) ** 0.5
    out = jax.block_until_ready(channel_attention(x, w1, w2))
    ref = _reference(x, w1, w2)
    assert out.shape == (B, C, 1, 1)
    assert jnp.allclose(out, ref, atol=1e-5, rtol=1e-5), "mismatch (aligned path)"

    # Test 2: force the multi-step streaming path with a partial final block
    # (HW = 169 -> two 128-lane steps; last step has only a 41-lane tail).
    H2 = W2 = 13
    x2 = jax.random.normal(kx2, (B, C, H2, W2), dtype=jnp.float32)
    out2 = jax.block_until_ready(channel_attention(x2, w1, w2, max_slabs_per_step=1))
    ref2 = _reference(x2, w1, w2)
    assert jnp.allclose(out2, ref2, atol=1e-5, rtol=1e-5), "mismatch (boundary path)"

    # Test 3: batch- and channel-tiled path (B_tile=8, multiple C tiles) with an
    # unaligned spatial extent handled in a single step (tail slice).
    B3, C3, H3, W3 = 16, 256, 13, 13
    hidden3 = C3 // 16
    x3 = jax.random.normal(kx3, (B3, C3, H3, W3), dtype=jnp.float32)
    w13 = jax.random.normal(k3, (hidden3, C3), dtype=jnp.float32) * (2.0 / C3) ** 0.5
    w23 = jax.random.normal(k4, (C3, hidden3), dtype=jnp.float32) * (2.0 / hidden3) ** 0.5
    out3 = jax.block_until_ready(channel_attention(x3, w13, w23))
    ref3 = _reference(x3, w13, w23)
    assert out3.shape == (B3, C3, 1, 1)
    assert jnp.allclose(out3, ref3, atol=1e-5, rtol=1e-5), "mismatch (tiled path)"

    print("KERNEL_OK")
</pallas_src>

<mosaic_0001>
module attributes {stable_mosaic.version = 11 : i64} {
  func.func @kernel(%arg0: i32, %arg1: i32, %arg2: i32, %arg3: memref<2x32x256xf32, #tpu.memory_space<vmem>>, %arg4: memref<1x2x32xf32, #tpu.memory_space<vmem>>, %arg5: memref<1x2x32xf32, #tpu.memory_space<vmem>>, %arg6: memref<2x32xf32, #tpu.memory_space<vmem>>, %arg7: memref<2x32xf32, #tpu.memory_space<vmem>>) attributes {dimension_semantics = [#tpu.dimension_semantics<parallel>, #tpu.dimension_semantics<parallel>, #tpu.dimension_semantics<arbitrary>], iteration_bounds = array<i64: 1, 1, 1>, scalar_prefetch = 0 : i64, scratch_operands = 2 : i64, tpu.core_type = #tpu.core_type<tc>, window_params = [{transform_indices = @transform_0, window_bounds = array<i64: 2, 32, 256>}, {transform_indices = @transform_1, window_bounds = array<i64: 1, 2, 32>}, {transform_indices = @transform_2, window_bounds = array<i64: 1, 2, 32>}]} {
    %c0_i32 = arith.constant 0 : i32
    %0 = arith.cmpi eq, %arg2, %c0_i32 : i32
    %1 = arith.extui %0 : i1 to i32
    %c0_i32_0 = arith.constant 0 : i32
    %2 = arith.cmpi ne, %1, %c0_i32_0 : i32
    scf.if %2 {
      %cst_16 = arith.constant 0.000000e+00 : f32
      %18 = vector.broadcast %cst_16 : f32 to vector<2x32xf32>
      %c0_17 = arith.constant 0 : index
      %c0_18 = arith.constant 0 : index
      %19 = vector.load %arg6[%c0_17, %c0_18] : memref<2x32xf32, #tpu.memory_space<vmem>>, vector<2x32xf32>
      tpu.vector_store %arg6[%c0_17, %c0_18], %18 {strides = array<i32>} : memref<2x32xf32, #tpu.memory_space<vmem>>, vector<2x32xf32>,
      %cst_19 = arith.constant 0xFF800000 : f32
      %20 = vector.broadcast %cst_19 : f32 to vector<2x32xf32>
      %c0_20 = arith.constant 0 : index
      %c0_21 = arith.constant 0 : index
      %21 = vector.load %arg7[%c0_20, %c0_21] : memref<2x32xf32, #tpu.memory_space<vmem>>, vector<2x32xf32>
      tpu.vector_store %arg7[%c0_20, %c0_21], %20 {strides = array<i32>} : memref<2x32xf32, #tpu.memory_space<vmem>>, vector<2x32xf32>,
    } else {
    }
    %c0 = arith.constant 0 : index
    %c0_1 = arith.constant 0 : index
    %c0_2 = arith.constant 0 : index
    %3 = vector.load %arg3[%c0, %c0_1, %c0_2] : memref<2x32x256xf32, #tpu.memory_space<vmem>>, vector<2x32x128xf32>
    %c0_3 = arith.constant 0 : index
    %c0_4 = arith.constant 0 : index
    %c128 = arith.constant 128 : index
    %4 = vector.load %arg3[%c0_3, %c0_4, %c128] : memref<2x32x256xf32, #tpu.memory_space<vmem>>, vector<2x32x128xf32>
    %5 = arith.addf %3, %4 : vector<2x32x128xf32>
    %6 = arith.maximumf %3, %4 : vector<2x32x128xf32>
    %c0_5 = arith.constant 0 : index
    %c0_6 = arith.constant 0 : index
    %7 = vector.load %arg6[%c0_5, %c0_6] : memref<2x32xf32, #tpu.memory_space<vmem>>, vector<2x32xf32>
    %cst = arith.constant dense<0.000000e+00> : vector<2x32xf32>
    %8 = vector.multi_reduction <add>, %5, %cst [2] : vector<2x32x128xf32> to vector<2x32xf32>
    %9 = arith.addf %7, %8 : vector<2x32xf32>
    %c0_7 = arith.constant 0 : index
    %c0_8 = arith.constant 0 : index
    %10 = vector.load %arg6[%c0_7, %c0_8] : memref<2x32xf32, #tpu.memory_space<vmem>>, vector<2x32xf32>
    tpu.vector_store %arg6[%c0_7, %c0_8], %9 {strides = array<i32>} : memref<2x32xf32, #tpu.memory_space<vmem>>, vector<2x32xf32>,
    %c0_9 = arith.constant 0 : index
    %c0_10 = arith.constant 0 : index
    %11 = vector.load %arg7[%c0_9, %c0_10] : memref<2x32xf32, #tpu.memory_space<vmem>>, vector<2x32xf32>
    %cst_11 = arith.constant dense<0xFF800000> : vector<2x32xf32>
    %12 = vector.multi_reduction <maximumf>, %6, %cst_11 [2] : vector<2x32x128xf32> to vector<2x32xf32>
    %13 = arith.maximumf %11, %12 : vector<2x32xf32>
    %c0_12 = arith.constant 0 : index
    %c0_13 = arith.constant 0 : index
    %14 = vector.load %arg7[%c0_12, %c0_13] : memref<2x32xf32, #tpu.memory_space<vmem>>, vector<2x32xf32>
    tpu.vector_store %arg7[%c0_12, %c0_13], %13 {strides = array<i32>} : memref<2x32xf32, #tpu.memory_space<vmem>>, vector<2x32xf32>,
    %c0_i32_14 = arith.constant 0 : i32
    %15 = arith.cmpi eq, %arg2, %c0_i32_14 : i32
    %16 = arith.extui %15 : i1 to i32
    %c0_i32_15 = arith.constant 0 : i32
    %17 = arith.cmpi ne, %16, %c0_i32_15 : i32
    scf.if %17 {
      %c0_16 = arith.constant 0 : index
      %c0_17 = arith.constant 0 : index
      %18 = vector.load %arg6[%c0_16, %c0_17] : memref<2x32xf32, #tpu.memory_space<vmem>>, vector<2x32xf32>
      %cst_18 = arith.constant 3.906250e-03 : f32
      %19 = vector.broadcast %cst_18 : f32 to vector<2x32xf32>
      %20 = arith.mulf %18, %19 : vector<2x32xf32>
      %c0_19 = arith.constant 0 : index
      %c0_20 = arith.constant 0 : index
      %c0_21 = arith.constant 0 : index
      %21 = vector.load %arg4[%c0_19, %c0_20, %c0_21] : memref<1x2x32xf32, #tpu.memory_space<vmem>>, vector<1x2x32xf32>
      %22 = vector.shape_cast %21 : vector<1x2x32xf32> to vector<2x32xf32>
      %23 = vector.shape_cast %20 : vector<2x32xf32> to vector<1x2x32xf32>
      tpu.vector_store %arg4[%c0_19, %c0_20, %c0_21], %23 {strides = array<i32>} : memref<1x2x32xf32, #tpu.memory_space<vmem>>, vector<1x2x32xf32>,
      %c0_22 = arith.constant 0 : index
      %c0_23 = arith.constant 0 : index
      %24 = vector.load %arg7[%c0_22, %c0_23] : memref<2x32xf32, #tpu.memory_space<vmem>>, vector<2x32xf32>
      %c0_24 = arith.constant 0 : index
      %c0_25 = arith.constant 0 : index
      %c0_26 = arith.constant 0 : index
      %25 = vector.load %arg5[%c0_24, %c0_25, %c0_26] : memref<1x2x32xf32, #tpu.memory_space<vmem>>, vector<1x2x32xf32>
      %26 = vector.shape_cast %25 : vector<1x2x32xf32> to vector<2x32xf32>
      %27 = vector.shape_cast %24 : vector<2x32xf32> to vector<1x2x32xf32>
      tpu.vector_store %arg5[%c0_24, %c0_25, %c0_26], %27 {strides = array<i32>} : memref<1x2x32xf32, #tpu.memory_space<vmem>>, vector<1x2x32xf32>,
    } else {
    }
    return
  }
  func.func @transform_0(%arg0: i32, %arg1: i32, %arg2: i32) -> (i32, i32, i32) {
    %c0_i32 = arith.constant 0 : i32
    return %arg0, %arg1, %arg2 : i32, i32, i32
  }
  func.func @transform_1(%arg0: i32, %arg1: i32, %arg2: i32) -> (i32, i32, i32) {
    %c0_i32 = arith.constant 0 : i32
    %c0_i32_0 = arith.constant 0 : i32
    return %arg1, %arg0, %c0_i32 : i32, i32, i32
  }
  func.func @transform_2(%arg0: i32, %arg1: i32, %arg2: i32) -> (i32, i32, i32) {
    %c0_i32 = arith.constant 0 : i32
    %c0_i32_0 = arith.constant 0 : i32
    return %arg1, %arg0, %c0_i32 : i32, i32, i32
  }
}

</mosaic_0001>

<llo_original>
// kernel: tpu_custom_call.1
$region0: #{tpu_custom_call.1}
  #allocation0 [shape = 'u32[]', space=smem, size = 0x4, offset = 0x4, fixed_abs, tag = 'smem constant byte address 0x4 - core index']
  #allocation1 [shape = 'u32[72,128]{1,0:T(1,128)}', space=vmem, size = 0x9000, scoped, tag = 'internal scratch']
  #allocation2 [shape = 'f32[2,32]{1,0:T(2,128)}', space=vmem, size = 0x400, scoped, tag = 'scratch operand']
  #allocation3 [shape = 'f32[2,32]{1,0:T(2,128)}', space=vmem, size = 0x400, scoped, tag = 'scratch operand']
  %s0 = inlined_call_operand.hbm [shape: f32[2,32,256], index: 0, kind: input, shape index: {}]
  %s1 = inlined_call_operand.hbm [shape: f32[1,2,32], index: 1, kind: output, shape index: {0}]
  %s2 = inlined_call_operand.hbm [shape: f32[1,2,32], index: 2, kind: output, shape index: {1}]
  %3 = xla_tuple %s1, %s2
  %s4 = sld [smem:[#allocation0]]
  $region34: #{tpu_custom_call.1} parent=0
    _
  %s6 = ssub.s32 1, %s4
  %s7 = scalar_select 0, %s6, %s4
  $region1: #{tpu_custom_call.1} parent=0
    #allocation4 [shape = 'u8[65536]{0}', space=vmem, size = 0x10000, scoped, tag = 'input window, operand 0, single buffered']
    #allocation5 [shape = 's32[1]{0}', space=sflag, size = 0x4, scoped, tag = 'scoped memory for tpu_custom_call.1']
    #allocation6 [shape = 's32[1]{0}', space=sflag, size = 0x4, scoped, tag = 'scoped memory for tpu_custom_call.1']
    #allocation7 [shape = 'u8[1024]{0}', space=vmem, size = 0x400, scoped, tag = 'output window, operand 0, single buffered']
    #allocation8 [shape = 'u8[1024]{0}', space=vmem, size = 0x400, scoped, tag = 'output window, operand 1, single buffered']
    #allocation9 [shape = 's32[1]{0}', space=sflag, size = 0x4, scoped, tag = 'scoped memory for tpu_custom_call.1']
    %8 = vsyncpa [#allocation5], 0
    %9 = vsyncpa [#allocation6], 0
    %10 = vsyncpa [#allocation9], 0
    // Predicated region
    $region2: #{tpu_custom_call.1} parent=1 // pred_check
      _
    $region3: #{tpu_custom_call.1} parent=1 // pred_check_branch
      %12 = sbr.rel (0) target = $region5
    $region4: #{tpu_custom_call.1} parent=1 // pred_region
      %14 = vsyncadd [#allocation5], 0
      %s15 = sshll.u32 %s0, 4
      %s16 = int_to_ptr.hbm [resolvable:$true] %s15
      %s17 = sshll.u32 [#allocation4], 4
      %s18 = int_to_ptr.vmem [resolvable:$true] %s17
      %23 = dma.hbm_to_vmem [thread:$0]  %s16, 2048, %s18, [#allocation5], 256, 256, 16
    $region5: #{tpu_custom_call.1} parent=1 // pred_fallthru
      _
    // Predicated region
    $region6: #{tpu_custom_call.1} parent=1 // pred_check
      _
    $region7: #{tpu_custom_call.1} parent=1 // pred_check_branch
      %25 = sbr.rel (0) target = $region9
    $region8: #{tpu_custom_call.1} parent=1 // pred_region
      %27 = dma.done [#allocation5], 2048
    $region9: #{tpu_custom_call.1} parent=1 // pred_fallthru
      _
    %p28 = scmp.eq.s32.totalorder 0, 0
    // Predicated region
    $region10: #{tpu_custom_call.1} parent=1 // pred_check
      %p29 = pneg %p28
    $region11: #{tpu_custom_call.1} parent=1 // pred_check_branch
      %31 = sbr.rel (%p29) target = $region13
    $region12: #{tpu_custom_call.1} parent=1 // pred_region
      %vm32 = vcmask 254976
      %33 = vst.msk [vmem:[#allocation2] sm:$0x3] %vm32, 0.0
      %34 = vst.msk [vmem:[#allocation3] sm:$0x3] %vm32, -inf
    $region13: #{tpu_custom_call.1} parent=1 // pred_fallthru
      _
    %v35 = vld [vmem:[#allocation4] sm:$0xff]
    %v36 = vld [vmem:[#allocation4 + $0x10] sm:$0xff]
    %v37 = vld [vmem:[#allocation4 + $0x20] sm:$0xff]
    %v38 = vld [vmem:[#allocation4 + $0x30] sm:$0xff]
    %v39 = vld [vmem:[#allocation4 + $0x40] sm:$0xff]
    %v40 = vld [vmem:[#allocation4 + $0x50] sm:$0xff]
    %v41 = vld [vmem:[#allocation4 + $0x60] sm:$0xff]
    %v42 = vld [vmem:[#allocation4 + $0x70] sm:$0xff]
    %v43 = vld [vmem:[#allocation4 + $0x8] sm:$0xff]
    %v44 = vld [vmem:[#allocation4 + $0x18] sm:$0xff]
    %v45 = vld [vmem:[#allocation4 + $0x28] sm:$0xff]
    %v46 = vld [vmem:[#allocation4 + $0x38] sm:$0xff]
    %v47 = vld [vmem:[#allocation4 + $0x48] sm:$0xff]
    %v48 = vld [vmem:[#allocation4 + $0x58] sm:$0xff]
    %v49 = vld [vmem:[#allocation4 + $0x68] sm:$0xff]
    %v50 = vld [vmem:[#allocation4 + $0x78] sm:$0xff]
    %v51 = vadd.f32 %v35, %v43
    %v52 = vadd.f32 %v36, %v44
    %v53 = vadd.f32 %v37, %v45
    %v54 = vadd.f32 %v38, %v46
    %v55 = vadd.f32 %v39, %v47
    %v56 = vadd.f32 %v40, %v48
    %v57 = vadd.f32 %v41, %v49
    %v58 = vadd.f32 %v42, %v50
    %v59 = vmax.f32 %v35, %v43
    %v60 = vmax.f32 %v36, %v44
    %v61 = vmax.f32 %v37, %v45
    %v62 = vmax.f32 %v38, %v46
    %v63 = vmax.f32 %v39, %v47
    %v64 = vmax.f32 %v40, %v48
    %v65 = vmax.f32 %v41, %v49
    %v66 = vmax.f32 %v42, %v50
    %v67 = vld [vmem:[#allocation2] sm:$0x3]
    %68 = vadd.xlane.f32.xlu0 %v51
    %v69 = vpop.xlane.xlu0 %68
    %70 = vadd.xlane.f32.xlu0 %v52
    %v71 = vpop.xlane.xlu0 %70
    %72 = vadd.xlane.f32.xlu0 %v53
    %v73 = vpop.xlane.xlu0 %72
    %74 = vadd.xlane.f32.xlu0 %v54
    %v75 = vpop.xlane.xlu0 %74
    %76 = vadd.xlane.f32.xlu0 %v55
    %v77 = vpop.xlane.xlu0 %76
    %78 = vadd.xlane.f32.xlu0 %v56
    %v79 = vpop.xlane.xlu0 %78
    %80 = vadd.xlane.f32.xlu0 %v57
    %v81 = vpop.xlane.xlu0 %80
    %82 = vadd.xlane.f32.xlu0 %v58
    %v83 = vpop.xlane.xlu0 %82
    %v92 = vlaneseq
    %v93 = vand.u32 %v92, 127
    %v94 = vperm.slane %v69, %v93
    %v95 = vadd.s32 %v93, 4294967288
    %v96 = vperm.slane %v71, %v95
    %vm97 = vcmask 130112
    %v98 = vsel %vm97, %v96, %v94
    %v99 = vadd.s32 %v93, 4294967280
    %v100 = vperm.slane %v73, %v99
    %vm101 = vcmask 195712
    %v102 = vsel %vm101, %v100, %v98
    %v103 = vadd.s32 %v93, 4294967272
    %v104 = vperm.slane %v75, %v103
    %vm105 = vcmask 261312
    %v106 = vsel %vm105, %v104, %v102
    %v107 = vperm.slane %v77, %v93
    %v108 = vperm.slane %v79, %v95
    %v109 = vsel %vm97, %v108, %v107
    %v110 = vperm.slane %v81, %v99
    %v111 = vsel %vm101, %v110, %v109
    %v112 = vperm.slane %v83, %v103
    %v113 = vsel %vm105, %v112, %v111
    %vm114 = vcmask 1041409
    %v115 = vsel %vm114, %v113, %v106
    %v117 = vadd.f32 %v67, %v115
    %vm118 = vcmask 254976
    %119 = vst.msk [vmem:[#allocation2] sm:$0x3] %vm118, %v117
    %v120 = vld [vmem:[#allocation3] sm:$0x3]
    %121 = vmax.xlane.f32.xlu0 %v59
    %v122 = vpop.xlane.xlu0 %121
    %123 = vmax.xlane.f32.xlu0 %v60
    %v124 = vpop.xlane.xlu0 %123
    %125 = vmax.xlane.f32.xlu0 %v61
    %v126 = vpop.xlane.xlu0 %125
    %127 = vmax.xlane.f32.xlu0 %v62
    %v128 = vpop.xlane.xlu0 %127
    %129 = vmax.xlane.f32.xlu0 %v63
    %v130 = vpop.xlane.xlu0 %129
    %131 = vmax.xlane.f32.xlu0 %v64
    %v132 = vpop.xlane.xlu0 %131
    %133 = vmax.xlane.f32.xlu0 %v65
    %v134 = vpop.xlane.xlu0 %133
    %135 = vmax.xlane.f32.xlu0 %v66
    %v136 = vpop.xlane.xlu0 %135
    %v145 = vperm.slane %v122, %v93
    %v146 = vperm.slane %v124, %v95
    %v147 = vsel %vm97, %v146, %v145
    %v148 = vperm.slane %v126, %v99
    %v149 = vsel %vm101, %v148, %v147
    %v150 = vperm.slane %v128, %v103
    %v151 = vsel %vm105, %v150, %v149
    %v152 = vperm.slane %v130, %v93
    %v153 = vperm.slane %v132, %v95
    %v154 = vsel %vm97, %v153, %v152
    %v155 = vperm.slane %v134, %v99
    %v156 = vsel %vm101, %v155, %v154
    %v157 = vperm.slane %v136, %v103
    %v158 = vsel %vm105, %v157, %v156
    %v159 = vsel %vm114, %v158, %v151
    %v161 = vmax.f32 %v120, %v159
    %162 = vst.msk [vmem:[#allocation3] sm:$0x3] %vm118, %v161
    // Predicated region
    $region14: #{tpu_custom_call.1} parent=1 // pred_check
      %p163 = pneg %p28
    $region15: #{tpu_custom_call.1} parent=1 // pred_check_branch
      %165 = sbr.rel (%p163) target = $region17
    $region16: #{tpu_custom_call.1} parent=1 // pred_region
      %v166 = vld [vmem:[#allocation2] sm:$0x3]
      %v167 = vmul.f32 %v166, 0.00390625
      %168 = vst.msk [vmem:[#allocation7] sm:$0x3] %vm118, %v167
      %v169 = vld [vmem:[#allocation3] sm:$0x3]
      %170 = vst.msk [vmem:[#allocation8] sm:$0x3] %vm118, %v169
    $region17: #{tpu_custom_call.1} parent=1 // pred_fallthru
      _
    // Predicated region
    $region18: #{tpu_custom_call.1} parent=1 // pred_check
      _
    $region19: #{tpu_custom_call.1} parent=1 // pred_check_branch
      %172 = sbr.rel (0) target = $region21
    $region20: #{tpu_custom_call.1} parent=1 // pred_region
      %174 = vsyncadd [#allocation6], 0
      %s176 = sshll.u32 [#allocation7], 4
      %s177 = int_to_ptr.vmem [resolvable:$true] %s176
      %s178 = sshll.u32 %s1, 4
      %s179 = int_to_ptr.hbm [resolvable:$true] %s178
      %181 = dma.vmem_to_hbm [thread:$0]  %s177, 32, %s179, [#allocation6]
    $region21: #{tpu_custom_call.1} parent=1 // pred_fallthru
      _
    // Predicated region
    $region22: #{tpu_custom_call.1} parent=1 // pred_check
      _
    $region23: #{tpu_custom_call.1} parent=1 // pred_check_branch
      %183 = sbr.rel (0) target = $region25
    $region24: #{tpu_custom_call.1} parent=1 // pred_region
      %185 = vsyncadd [#allocation9], 0
      %s187 = sshll.u32 [#allocation8], 4
      %s188 = int_to_ptr.vmem [resolvable:$true] %s187
      %s189 = sshll.u32 %s2, 4
      %s190 = int_to_ptr.hbm [resolvable:$true] %s189
      %192 = dma.vmem_to_hbm [thread:$0]  %s188, 32, %s190, [#allocation9]
    $region25: #{tpu_custom_call.1} parent=1 // pred_fallthru
      _
    // Predicated region
    $region26: #{tpu_custom_call.1} parent=1 // pred_check
      _
    $region27: #{tpu_custom_call.1} parent=1 // pred_check_branch
      %194 = sbr.rel (0) target = $region29
    $region28: #{tpu_custom_call.1} parent=1 // pred_region
      %196 = dma.done [#allocation6], 32
    $region29: #{tpu_custom_call.1} parent=1 // pred_fallthru
      _
    // Predicated region
    $region30: #{tpu_custom_call.1} parent=1 // pred_check
      _
    $region31: #{tpu_custom_call.1} parent=1 // pred_check_branch
      %198 = sbr.rel (0) target = $region33
    $region32: #{tpu_custom_call.1} parent=1 // pred_region
      %200 = dma.done [#allocation9], 32
    $region33: #{tpu_custom_call.1} parent=1 // pred_fallthru
      _
    %201 = vsyncpa [#allocation5], 1
    %202 = vsyncpa [#allocation6], 1
    %203 = vsyncpa [#allocation9], 1

</llo_original>
